<compile_context>
chip_gen: v5e
topology: v5e:2x2
jax: 0.10.0
libtpu: 0.0.40
codegen_flags: <defaults>
</compile_context>

<pallas_src>
import math

import jax
import jax.numpy as jnp
from jax.experimental import pallas as pl
from jax.experimental.pallas import tpu as pltpu


_GELU_C = math.sqrt(2.0 / math.pi)


def feedforward_kernel(x_ref, w1_ref, b1_ref, w2_ref, b2_ref, o_ref, acc_ref):
    # x_ref:  (TM, D)  native dtype (cast to bf16 in-kernel)
    # w1_ref: (D, TH)  bf16,  b1_ref: (1, TH) f32
    # w2_ref: (TH, D)  bf16,  b2_ref: (1, D)  f32
    # o_ref:  (TM, D)  output dtype
    # acc_ref:(TM, D)  f32 scratch, persists across the H (reduction) axis
    j = pl.program_id(1)

    @pl.when(j == 0)
    def _init():
        # Fold the second-layer bias into the accumulator init.
        acc_ref[...] = jnp.broadcast_to(
            b2_ref[...].astype(jnp.float32), acc_ref.shape
        )

    # First linear (this TH slice): (TM, D) @ (D, TH) -> f32, + bias slice.
    x_bf = x_ref[...].astype(jnp.bfloat16)
    h = (
        jnp.dot(x_bf, w1_ref[...], preferred_element_type=jnp.float32)
        + b1_ref[...]
    )

    # tanh-approx GELU in f32, factored inner polynomial:
    #   c*(h + 0.044715*h^3) == c*h*(1 + 0.044715*h*h)
    inner = jnp.float32(_GELU_C) * h * (1.0 + jnp.float32(0.044715) * (h * h))
    g = 0.5 * h * (1.0 + jnp.tanh(inner))

    # Dropout(p=0.0) is the identity in both train and eval -> no-op.

    # Second linear, accumulated over H tiles: (TM, TH) @ (TH, D) += acc.
    acc_ref[...] += jnp.dot(
        g.astype(jnp.bfloat16), w2_ref[...], preferred_element_type=jnp.float32
    )

    @pl.when(j == pl.num_programs(1) - 1)
    def _finalize():
        o_ref[...] = acc_ref[...].astype(o_ref.dtype)


def _round_up(x, m):
    return ((x + m - 1) // m) * m


def _vmem_limit_bytes():
    """Per-generation VMEM limit: ~80% of capacity, capped at 100 MiB."""
    try:
        cap = pltpu.get_tpu_info().vmem_capacity_bytes
    except Exception:
        cap = 64 * 1024 * 1024  # conservative fallback (v7x per-TC VMEM)
    return min(int(cap * 0.80), 100 * 1024 * 1024)


def _select_tiles(T, D, H, x_itemsize, out_itemsize, vmem_limit,
                  block_tokens, block_hidden):
    """Largest (TM, TH) whose resident VMEM footprint fits ~75% of the limit.

    TM is prioritized (arithmetic-intensity knob: W1/W2 are re-streamed from
    HBM once per token tile), then TH (fewer accumulator RMW passes).
    """
    budget = int(vmem_limit * 0.75)
    T16 = _round_up(max(T, 1), 16)     # bf16 sublane packing -> 16-row multiple
    H128 = _round_up(H, 128)

    def resident_bytes(tm, th):
        return (
            2 * tm * D * x_itemsize        # x tile, double-buffered, native dtype
            + 2 * D * th * 2               # w1 bf16, double-buffered
            + 2 * th * D * 2               # w2 bf16, double-buffered
            + tm * D * 4                   # f32 accumulator scratch
            + 2 * tm * D * out_itemsize    # out tile, double-buffered
            + 2 * tm * th * 4              # (TM, TH) f32 GELU intermediates
            + 2 * th * 4 + 2 * D * 4       # biases
        )

    tm_cands = ([block_tokens] if block_tokens is not None
                else [1024, 768, 512, 256, 128, 64, 32, 16])
    th_cands = ([block_hidden] if block_hidden is not None
                else [2048, 1024, 512, 256, 128])

    TM = min(tm_cands[-1], T16)
    TH = min(th_cands[-1], H128)
    done = False
    for tm in tm_cands:
        tm_eff = min(tm, T16)
        for th in th_cands:
            th_eff = min(th, H128)
            if resident_bytes(tm_eff, th_eff) <= budget:
                TM, TH = tm_eff, th_eff
                done = True
                break
        if done:
            break

    # v7x megacore: guarantee >=2 token tiles (grid axis 0 is "parallel") when
    # the problem is large enough that each half still feeds the MXU well.
    if block_tokens is None and TM >= T16 and T16 >= 512:
        TM = _round_up(T16 // 2, 16)

    return TM, TH


def feedforward(x, w1, b1, w2, b2, *, block_tokens=None, block_hidden=None):
    """x: (B, N, D).  w1: (D, H), b1: (H,), w2: (H, D), b2: (D,)."""
    B, N, D = x.shape
    H = w1.shape[1]
    T = B * N

    out_dtype = x.dtype
    vmem_limit = _vmem_limit_bytes()
    TM, TH = _select_tiles(
        T, D, H,
        jnp.dtype(x.dtype).itemsize, jnp.dtype(out_dtype).itemsize,
        vmem_limit, block_tokens, block_hidden,
    )

    T_pad = _round_up(T, TM)
    H_pad = _round_up(H, TH)

    # Flatten tokens; pad only when needed.  x stays in its native dtype —
    # the bf16 cast happens in-kernel on the resident tile, so there is no
    # wrapper-side HBM round trip for the activations.
    x2d = x.reshape(T, D)
    if T_pad != T:
        x2d = jnp.pad(x2d, ((0, T_pad - T), (0, 0)))

    # Weight pad + bf16 cast. Padded hidden columns/rows are zero, so gelu(0)=0
    # contributes exactly 0 to the output -> numerically exact.
    # NOTE: in production, cache/precompute these casts once per weight set.
    w1p, b1p, w2p = w1, b1, w2
    if H_pad != H:
        w1p = jnp.pad(w1, ((0, 0), (0, H_pad - H)))
        b1p = jnp.pad(b1, (0, H_pad - H))
        w2p = jnp.pad(w2, ((0, H_pad - H), (0, 0)))
    w1p = w1p.astype(jnp.bfloat16)
    w2p = w2p.astype(jnp.bfloat16)
    b1_2d = b1p.reshape(1, H_pad).astype(jnp.float32)
    b2_2d = b2.reshape(1, D).astype(jnp.float32)

    num_token_tiles = T_pad // TM
    grid = (num_token_tiles, H_pad // TH)  # reduction (hidden) axis last

    cost = pl.CostEstimate(
        flops=4 * T_pad * D * H_pad,            # two matmuls, 2*T*D*H each
        transcendentals=T_pad * H_pad,          # tanh
        bytes_accessed=(
            x2d.size * jnp.dtype(x2d.dtype).itemsize
            # weights (and biases) are re-streamed once per token tile:
            + num_token_tiles * (
                w1p.size * 2 + w2p.size * 2 + b1_2d.size * 4 + b2_2d.size * 4
            )
            + T_pad * D * jnp.dtype(out_dtype).itemsize
        ),
    )

    out2d = pl.pallas_call(
        feedforward_kernel,
        out_shape=jax.ShapeDtypeStruct((T_pad, D), out_dtype),
        grid_spec=pltpu.PrefetchScalarGridSpec(
            num_scalar_prefetch=0,
            grid=grid,
            in_specs=[
                pl.BlockSpec((TM, D), lambda i, j: (i, 0)),   # x: resident across H
                pl.BlockSpec((D, TH), lambda i, j: (0, j)),   # w1 column slice
                pl.BlockSpec((1, TH), lambda i, j: (0, j)),   # b1 slice
                pl.BlockSpec((TH, D), lambda i, j: (j, 0)),   # w2 row slice
                pl.BlockSpec((1, D), lambda i, j: (0, 0)),    # b2 (constant)
            ],
            out_specs=pl.BlockSpec((TM, D), lambda i, j: (i, 0)),  # acc over j
            scratch_shapes=[pltpu.VMEM((TM, D), jnp.float32)],
        ),
        compiler_params=pltpu.CompilerParams(
            dimension_semantics=("parallel", "arbitrary"),
            vmem_limit_bytes=vmem_limit,
        ),
        cost_estimate=cost,
    )(x2d, w1p, b1_2d, w2p, b2_2d)

    return out2d[:T].reshape(B, N, D)


def feedforward_ref(x, w1, b1, w2, b2):
    """Pure-JAX reference (mirrors the PyTorch module, f32)."""
    h = jnp.einsum("bnd,dh->bnh", x, w1) + b1
    g = 0.5 * h * (1.0 + jnp.tanh(_GELU_C * (h + 0.044715 * jnp.power(h, 3))))
    return jnp.einsum("bnh,hd->bnd", g, w2) + b2


if __name__ == "__main__":
    # Small shapes: batch=2, seq=8, dim=128, hidden_dim=256 (lane-aligned).
    B, N, D, H = 2, 8, 128, 256

    key = jax.random.PRNGKey(0)
    kx, kw1, kb1, kw2, kb2, kx2 = jax.random.split(key, 6)

    x = jax.random.normal(kx, (B, N, D), dtype=jnp.float32)

    # Deterministic parameter init (uniform, like PyTorch Linear default bounds).
    lim1 = 1.0 / math.sqrt(D)
    lim2 = 1.0 / math.sqrt(H)
    w1 = jax.random.uniform(kw1, (D, H), jnp.float32, -lim1, lim1)
    b1 = jax.random.uniform(kb1, (H,), jnp.float32, -lim1, lim1)
    w2 = jax.random.uniform(kw2, (H, D), jnp.float32, -lim2, lim2)
    b2 = jax.random.uniform(kb2, (D,), jnp.float32, -lim2, lim2)

    # Auto (VMEM-budget-aware) tiling.
    ref = feedforward_ref(x, w1, b1, w2, b2)
    out = jax.block_until_ready(feedforward(x, w1, b1, w2, b2))
    assert out.shape == (B, N, D)
    # bf16 MXU operands with f32 accumulation -> loosened tolerance vs f32 ref.
    assert jnp.allclose(out, ref, atol=1e-2, rtol=1e-2), "mismatch (auto tiles)"

    # Multi-tile grid + token-padding path: T = 2*9 = 18 tokens, TM=16 -> 2
    # token tiles (T_pad=32), TH=128 -> 2 streamed hidden tiles.
    x2 = jax.random.normal(kx2, (B, 9, D), dtype=jnp.float32)
    ref2 = feedforward_ref(x2, w1, b1, w2, b2)
    out2 = jax.block_until_ready(
        feedforward(x2, w1, b1, w2, b2, block_tokens=16, block_hidden=128)
    )
    assert out2.shape == (B, 9, D)
    assert jnp.allclose(out2, ref2, atol=1e-2, rtol=1e-2), "mismatch (small tiles)"

    print("KERNEL_OK")
</pallas_src>

<mosaic_0001>
module attributes {stable_mosaic.version = 11 : i64} {
  func.func @feedforward_kernel(%arg0: i32, %arg1: i32, %arg2: memref<16x128xf32, #tpu.memory_space<vmem>>, %arg3: memref<128x256xbf16, #tpu.memory_space<vmem>>, %arg4: memref<1x256xf32, #tpu.memory_space<vmem>>, %arg5: memref<256x128xbf16, #tpu.memory_space<vmem>>, %arg6: memref<1x128xf32, #tpu.memory_space<vmem>>, %arg7: memref<16x128xf32, #tpu.memory_space<vmem>>, %arg8: memref<16x128xf32, #tpu.memory_space<vmem>>) attributes {dimension_semantics = [#tpu.dimension_semantics<parallel>, #tpu.dimension_semantics<arbitrary>], iteration_bounds = array<i64: 1, 1>, scalar_prefetch = 0 : i64, scratch_operands = 1 : i64, tpu.core_type = #tpu.core_type<tc>, window_params = [{transform_indices = @transform_0, window_bounds = array<i64: 16, 128>}, {transform_indices = @transform_1, window_bounds = array<i64: 128, 256>}, {transform_indices = @transform_2, window_bounds = array<i64: 1, 256>}, {transform_indices = @transform_3, window_bounds = array<i64: 256, 128>}, {pipeline_mode = #tpu.pipeline_mode<synchronous>, transform_indices = @transform_4, window_bounds = array<i64: 1, 128>}, {transform_indices = @transform_5, window_bounds = array<i64: 16, 128>}]} {
    %c0_i32 = arith.constant 0 : i32
    %0 = arith.cmpi eq, %arg1, %c0_i32 : i32
    %1 = arith.extui %0 : i1 to i32
    %c0_i32_0 = arith.constant 0 : i32
    %2 = arith.cmpi ne, %1, %c0_i32_0 : i32
    scf.if %2 {
      %c0_20 = arith.constant 0 : index
      %c0_21 = arith.constant 0 : index
      %33 = vector.load %arg6[%c0_20, %c0_21] : memref<1x128xf32, #tpu.memory_space<vmem>>, vector<1x128xf32>
      %34 = vector.shape_cast %33 : vector<1x128xf32> to vector<1x128xf32>
      %35 = vector.broadcast %34 : vector<1x128xf32> to vector<16x128xf32>
      %c0_22 = arith.constant 0 : index
      %c0_23 = arith.constant 0 : index
      %36 = vector.load %arg8[%c0_22, %c0_23] : memref<16x128xf32, #tpu.memory_space<vmem>>, vector<16x128xf32>
      tpu.vector_store %arg8[%c0_22, %c0_23], %35 {strides = array<i32>} : memref<16x128xf32, #tpu.memory_space<vmem>>, vector<16x128xf32>,
    } else {
    }
    %c0 = arith.constant 0 : index
    %c0_1 = arith.constant 0 : index
    %3 = vector.load %arg2[%c0, %c0_1] : memref<16x128xf32, #tpu.memory_space<vmem>>, vector<16x128xf32>
    %4 = arith.truncf %3 : vector<16x128xf32> to vector<16x128xbf16>
    %c0_2 = arith.constant 0 : index
    %c0_3 = arith.constant 0 : index
    %5 = vector.load %arg3[%c0_2, %c0_3] : memref<128x256xbf16, #tpu.memory_space<vmem>>, vector<128x256xbf16>
    %cst = arith.constant dense<0.000000e+00> : vector<16x256xf32>
    %6 = tpu.matmul %4, %5, %cst {dimension_numbers = #tpu.dot_dimension_numbers<[1], [0], [0], [1], [0, 0, 1, 1], [], []>} : vector<16x128xbf16>, vector<128x256xbf16>, vector<16x256xf32> -> vector<16x256xf32>
    %c0_4 = arith.constant 0 : index
    %c0_5 = arith.constant 0 : index
    %7 = vector.load %arg4[%c0_4, %c0_5] : memref<1x256xf32, #tpu.memory_space<vmem>>, vector<1x256xf32>
    %8 = vector.broadcast %7 : vector<1x256xf32> to vector<16x256xf32>
    %9 = arith.addf %6, %8 : vector<16x256xf32>
    %cst_6 = arith.constant 0.797884583 : f32
    %10 = vector.broadcast %cst_6 : f32 to vector<16x256xf32>
    %11 = arith.mulf %10, %9 : vector<16x256xf32>
    %12 = arith.mulf %9, %9 : vector<16x256xf32>
    %cst_7 = arith.constant 4.471500e-02 : f32
    %13 = vector.broadcast %cst_7 : f32 to vector<16x256xf32>
    %14 = arith.mulf %13, %12 : vector<16x256xf32>
    %cst_8 = arith.constant 1.000000e+00 : f32
    %15 = vector.broadcast %cst_8 : f32 to vector<16x256xf32>
    %16 = arith.addf %15, %14 : vector<16x256xf32>
    %17 = arith.mulf %11, %16 : vector<16x256xf32>
    %cst_9 = arith.constant 5.000000e-01 : f32
    %18 = vector.broadcast %cst_9 : f32 to vector<16x256xf32>
    %19 = arith.mulf %18, %9 : vector<16x256xf32>
    %20 = math.tanh %17 : vector<16x256xf32>
    %cst_10 = arith.constant 1.000000e+00 : f32
    %21 = vector.broadcast %cst_10 : f32 to vector<16x256xf32>
    %22 = arith.addf %21, %20 : vector<16x256xf32>
    %23 = arith.mulf %19, %22 : vector<16x256xf32>
    %c0_11 = arith.constant 0 : index
    %c0_12 = arith.constant 0 : index
    %24 = vector.load %arg8[%c0_11, %c0_12] : memref<16x128xf32, #tpu.memory_space<vmem>>, vector<16x128xf32>
    %25 = arith.truncf %23 : vector<16x256xf32> to vector<16x256xbf16>
    %c0_13 = arith.constant 0 : index
    %c0_14 = arith.constant 0 : index
    %26 = vector.load %arg5[%c0_13, %c0_14] : memref<256x128xbf16, #tpu.memory_space<vmem>>, vector<256x128xbf16>
    %cst_15 = arith.constant dense<0.000000e+00> : vector<16x128xf32>
    %27 = tpu.matmul %25, %26, %cst_15 {dimension_numbers = #tpu.dot_dimension_numbers<[1], [0], [0], [1], [0, 0, 1, 1], [], []>} : vector<16x256xbf16>, vector<256x128xbf16>, vector<16x128xf32> -> vector<16x128xf32>
    %28 = arith.addf %24, %27 : vector<16x128xf32>
    %c0_16 = arith.constant 0 : index
    %c0_17 = arith.constant 0 : index
    %29 = vector.load %arg8[%c0_16, %c0_17] : memref<16x128xf32, #tpu.memory_space<vmem>>, vector<16x128xf32>
    tpu.vector_store %arg8[%c0_16, %c0_17], %28 {strides = array<i32>} : memref<16x128xf32, #tpu.memory_space<vmem>>, vector<16x128xf32>,
    %c0_i32_18 = arith.constant 0 : i32
    %30 = arith.cmpi eq, %arg1, %c0_i32_18 : i32
    %31 = arith.extui %30 : i1 to i32
    %c0_i32_19 = arith.constant 0 : i32
    %32 = arith.cmpi ne, %31, %c0_i32_19 : i32
    scf.if %32 {
      %c0_20 = arith.constant 0 : index
      %c0_21 = arith.constant 0 : index
      %33 = vector.load %arg8[%c0_20, %c0_21] : memref<16x128xf32, #tpu.memory_space<vmem>>, vector<16x128xf32>
      %c0_22 = arith.constant 0 : index
      %c0_23 = arith.constant 0 : index
      %34 = vector.load %arg7[%c0_22, %c0_23] : memref<16x128xf32, #tpu.memory_space<vmem>>, vector<16x128xf32>
      tpu.vector_store %arg7[%c0_22, %c0_23], %33 {strides = array<i32>} : memref<16x128xf32, #tpu.memory_space<vmem>>, vector<16x128xf32>,
    } else {
    }
    return
  }
  func.func @transform_0(%arg0: i32, %arg1: i32) -> (i32, i32) {
    %c0_i32 = arith.constant 0 : i32
    %c0_i32_0 = arith.constant 0 : i32
    return %arg0, %c0_i32 : i32, i32
  }
  func.func @transform_1(%arg0: i32, %arg1: i32) -> (i32, i32) {
    %c0_i32 = arith.constant 0 : i32
    %c0_i32_0 = arith.constant 0 : i32
    return %c0_i32, %arg1 : i32, i32
  }
  func.func @transform_2(%arg0: i32, %arg1: i32) -> (i32, i32) {
    %c0_i32 = arith.constant 0 : i32
    %c0_i32_0 = arith.constant 0 : i32
    return %c0_i32, %arg1 : i32, i32
  }
  func.func @transform_3(%arg0: i32, %arg1: i32) -> (i32, i32) {
    %c0_i32 = arith.constant 0 : i32
    %c0_i32_0 = arith.constant 0 : i32
    return %arg1, %c0_i32 : i32, i32
  }
  func.func @transform_4(%arg0: i32, %arg1: i32) -> (i32, i32) {
    %c0_i32 = arith.constant 0 : i32
    %c0_i32_0 = arith.constant 0 : i32
    %c0_i32_1 = arith.constant 0 : i32
    return %c0_i32, %c0_i32_0 : i32, i32
  }
  func.func @transform_5(%arg0: i32, %arg1: i32) -> (i32, i32) {
    %c0_i32 = arith.constant 0 : i32
    %c0_i32_0 = arith.constant 0 : i32
    return %arg0, %c0_i32 : i32, i32
  }
}

</mosaic_0001>

<llo_original>
// kernel: tpu_custom_call.1
$region0: #{tpu_custom_call.1}
  #allocation0 [shape = 'u32[]', space=smem, size = 0x4, offset = 0x4, fixed_abs, tag = 'smem constant byte address 0x4 - core index']
  #allocation1 [shape = 'u32[72,128]{1,0:T(1,128)}', space=vmem, size = 0x9000, scoped, tag = 'internal scratch']
  #allocation2 [shape = 'f32[16,128]{1,0:T(8,128)}', space=vmem, size = 0x2000, scoped, tag = 'scratch operand']
  %s0 = inlined_call_operand.hbm [shape: f32[16,128], index: 0, kind: input, shape index: {}]
  %s1 = inlined_call_operand.hbm [shape: bf16[128,256], index: 1, kind: input, shape index: {}]
  %s2 = inlined_call_operand.hbm [shape: f32[1,256], index: 2, kind: input, shape index: {}]
  %s3 = inlined_call_operand.hbm [shape: bf16[256,128], index: 3, kind: input, shape index: {}]
  %s4 = inlined_call_operand.vmem [shape: f32[1,128], index: 4, kind: input, shape index: {}]
  %s5 = inlined_call_operand.hbm [shape: f32[16,128], index: 5, kind: output, shape index: {}]
  %s6 = sld [smem:[#allocation0]]
  $region54: #{tpu_custom_call.1} parent=0
    _
  %s8 = ssub.s32 1, %s6
  %s9 = scalar_select 0, %s8, %s6
  $region1: #{tpu_custom_call.1} parent=0
    #allocation3 [shape = 'u8[8192]{0}', space=vmem, size = 0x2000, scoped, tag = 'input window, operand 0, single buffered']
    #allocation4 [shape = 's32[1]{0}', space=sflag, size = 0x4, scoped, tag = 'scoped memory for tpu_custom_call.1']
    #allocation5 [shape = 's32[1]{0}', space=sflag, size = 0x4, scoped, tag = 'scoped memory for tpu_custom_call.1']
    #allocation6 [shape = 'u8[65536]{0}', space=vmem, size = 0x10000, scoped, tag = 'input window, operand 1, single buffered']
    #allocation7 [shape = 's32[1]{0}', space=sflag, size = 0x4, scoped, tag = 'scoped memory for tpu_custom_call.1']
    #allocation8 [shape = 'u8[1024]{0}', space=vmem, size = 0x400, scoped, tag = 'input window, operand 2, single buffered']
    #allocation9 [shape = 'u8[65536]{0}', space=vmem, size = 0x10000, scoped, tag = 'input window, operand 3, single buffered']
    #allocation10 [shape = 's32[1]{0}', space=sflag, size = 0x4, scoped, tag = 'scoped memory for tpu_custom_call.1']
    #allocation11 [shape = 'u8[8192]{0}', space=vmem, size = 0x2000, scoped, tag = 'output window, operand 0, single buffered']
    %10 = vsyncpa [#allocation4], 0
    %11 = vsyncpa [#allocation7], 0
    %12 = vsyncpa [#allocation10], 0
    %13 = vsyncpa [#allocation5], 0
    // Predicated region
    $region2: #{tpu_custom_call.1} parent=1 // pred_check
      _
    $region3: #{tpu_custom_call.1} parent=1 // pred_check_branch
      %15 = sbr.rel (0) target = $region5
    $region4: #{tpu_custom_call.1} parent=1 // pred_region
      %17 = vsyncadd [#allocation4], 0
      %s18 = sshll.u32 %s0, 4
      %s19 = int_to_ptr.hbm [resolvable:$true] %s18
      %s20 = sshll.u32 [#allocation3], 4
      %s21 = int_to_ptr.vmem [resolvable:$true] %s20
      %26 = dma.hbm_to_vmem [thread:$0]  %s19, 256, %s21, [#allocation4], 128, 128, 8
    $region5: #{tpu_custom_call.1} parent=1 // pred_fallthru
      _
    // Predicated region
    $region6: #{tpu_custom_call.1} parent=1 // pred_check
      _
    $region7: #{tpu_custom_call.1} parent=1 // pred_check_branch
      %28 = sbr.rel (0) target = $region9
    $region8: #{tpu_custom_call.1} parent=1 // pred_region
      %30 = vsyncadd [#allocation7], 0
      %s31 = sshll.u32 %s1, 4
      %s32 = int_to_ptr.hbm [resolvable:$true] %s31
      %s33 = sshll.u32 [#allocation6], 4
      %s34 = int_to_ptr.vmem [resolvable:$true] %s33
      %39 = dma.hbm_to_vmem [thread:$0]  %s32, 2048, %s34, [#allocation7], 128, 128, 8
    $region9: #{tpu_custom_call.1} parent=1 // pred_fallthru
      _
    // Predicated region
    $region10: #{tpu_custom_call.1} parent=1 // pred_check
      _
    $region11: #{tpu_custom_call.1} parent=1 // pred_check_branch
      %41 = sbr.rel (0) target = $region13
    $region12: #{tpu_custom_call.1} parent=1 // pred_region
      %43 = vsyncadd [#allocation7], 0
      %s45 = sshll.u32 %s2, 4
      %s46 = int_to_ptr.hbm [resolvable:$true] %s45
      %s47 = sshll.u32 [#allocation8], 4
      %s48 = int_to_ptr.vmem [resolvable:$true] %s47
      %50 = dma.hbm_to_vmem [thread:$0]  %s46, 32, %s48, [#allocation7]
    $region13: #{tpu_custom_call.1} parent=1 // pred_fallthru
      _
    // Predicated region
    $region14: #{tpu_custom_call.1} parent=1 // pred_check
      _
    $region15: #{tpu_custom_call.1} parent=1 // pred_check_branch
      %52 = sbr.rel (0) target = $region17
    $region16: #{tpu_custom_call.1} parent=1 // pred_region
      %54 = vsyncadd [#allocation10], 0
      %s55 = sshll.u32 %s3, 4
      %s56 = int_to_ptr.hbm [resolvable:$true] %s55
      %s57 = sshll.u32 [#allocation9], 4
      %s58 = int_to_ptr.vmem [resolvable:$true] %s57
      %63 = dma.hbm_to_vmem [thread:$0]  %s56, 2048, %s58, [#allocation10], 64, 64, 4
    $region17: #{tpu_custom_call.1} parent=1 // pred_fallthru
      _
    // Predicated region
    $region18: #{tpu_custom_call.1} parent=1 // pred_check
      _
    $region19: #{tpu_custom_call.1} parent=1 // pred_check_branch
      %65 = sbr.rel (0) target = $region21
    $region20: #{tpu_custom_call.1} parent=1 // pred_region
      _
    $region21: #{tpu_custom_call.1} parent=1 // pred_fallthru
      _
    // Predicated region
    $region22: #{tpu_custom_call.1} parent=1 // pred_check
      _
    $region23: #{tpu_custom_call.1} parent=1 // pred_check_branch
      %67 = sbr.rel (0) target = $region25
    $region24: #{tpu_custom_call.1} parent=1 // pred_region
      %69 = dma.done [#allocation4], 256
    $region25: #{tpu_custom_call.1} parent=1 // pred_fallthru
      _
    // Predicated region
    $region26: #{tpu_custom_call.1} parent=1 // pred_check
      _
    $region27: #{tpu_custom_call.1} parent=1 // pred_check_branch
      %71 = sbr.rel (0) target = $region29
    $region28: #{tpu_custom_call.1} parent=1 // pred_region
      %73 = dma.done [#allocation7], 2048
    $region29: #{tpu_custom_call.1} parent=1 // pred_fallthru
      _
    // Predicated region
    $region30: #{tpu_custom_call.1} parent=1 // pred_check
      _
    $region31: #{tpu_custom_call.1} parent=1 // pred_check_branch
      %75 = sbr.rel (0) target = $region33
    $region32: #{tpu_custom_call.1} parent=1 // pred_region
      %77 = dma.done [#allocation7], 32
    $region33: #{tpu_custom_call.1} parent=1 // pred_fallthru
      _
    // Predicated region
    $region34: #{tpu_custom_call.1} parent=1 // pred_check
      _
    $region35: #{tpu_custom_call.1} parent=1 // pred_check_branch
      %79 = sbr.rel (0) target = $region37
    $region36: #{tpu_custom_call.1} parent=1 // pred_region
      %81 = dma.done [#allocation10], 2048
    $region37: #{tpu_custom_call.1} parent=1 // pred_fallthru
      _
    %p82 = scmp.eq.s32.totalorder 0, 0
    // Predicated region
    $region38: #{tpu_custom_call.1} parent=1 // pred_check
      %p83 = pneg %p82
    $region39: #{tpu_custom_call.1} parent=1 // pred_check_branch
      %85 = sbr.rel (%p83) target = $region41
    $region40: #{tpu_custom_call.1} parent=1 // pred_region
      %v86 = vld [vmem:[%s4] sm:$0x1]
      %v88 = vperm.slane %v86, 0
      %90 = vst [vmem:[#allocation2] sm:$0xff] %v88
      %91 = vst [vmem:[#allocation2 + $0x8] sm:$0xff] %v88
    $region41: #{tpu_custom_call.1} parent=1 // pred_fallthru
      _
    %v92 = vld [vmem:[#allocation3] sm:$0xff]
    %v93 = vld [vmem:[#allocation3 + $0x8] sm:$0xff]
    %v94 = vpack.c.bf16 %v93, %v92
    %v95 = vld [vmem:[#allocation6] sm:$0xff]
    %v96 = vld [vmem:[#allocation6 + $0x8] sm:$0xff]
    %v97 = vld [vmem:[#allocation6 + $0x10] sm:$0xff]
    %v98 = vld [vmem:[#allocation6 + $0x18] sm:$0xff]
    %v99 = vld [vmem:[#allocation6 + $0x20] sm:$0xff]
    %v100 = vld [vmem:[#allocation6 + $0x28] sm:$0xff]
    %v101 = vld [vmem:[#allocation6 + $0x30] sm:$0xff]
    %v102 = vld [vmem:[#allocation6 + $0x38] sm:$0xff]
    %v103 = vld [vmem:[#allocation6 + $0x40] sm:$0xff]
    %v104 = vld [vmem:[#allocation6 + $0x48] sm:$0xff]
    %v105 = vld [vmem:[#allocation6 + $0x50] sm:$0xff]
    %v106 = vld [vmem:[#allocation6 + $0x58] sm:$0xff]
    %v107 = vld [vmem:[#allocation6 + $0x60] sm:$0xff]
    %v108 = vld [vmem:[#allocation6 + $0x68] sm:$0xff]
    %v109 = vld [vmem:[#allocation6 + $0x70] sm:$0xff]
    %v110 = vld [vmem:[#allocation6 + $0x78] sm:$0xff]
    %v111 = vld [vmem:[#allocation8] sm:$0x3]
    %v113 = vperm.slane %v111, 0
    %v114 = vperm.slane %v111, 1
    %v133 = vunpack.c.l.b16 %v95
    %v134 = vunpack.c.h.b16 %v95
    %v135 = vunpack.c.l.b16 %v96
    %v136 = vunpack.c.h.b16 %v96
    %v137 = vunpack.c.l.b16 %v97
    %v138 = vunpack.c.h.b16 %v97
    %v139 = vunpack.c.l.b16 %v98
    %v140 = vunpack.c.h.b16 %v98
    %v141 = vunpack.c.l.b16 %v99
    %v142 = vunpack.c.h.b16 %v99
    %v143 = vunpack.c.l.b16 %v100
    %v144 = vunpack.c.h.b16 %v100
    %v145 = vunpack.c.l.b16 %v101
    %v146 = vunpack.c.h.b16 %v101
    %v147 = vunpack.c.l.b16 %v102
    %v148 = vunpack.c.h.b16 %v102
    %v149 = vunpack.c.l.b16 %v103
    %v150 = vunpack.c.h.b16 %v103
    %v151 = vunpack.c.l.b16 %v104
    %v152 = vunpack.c.h.b16 %v104
    %v153 = vunpack.c.l.b16 %v105
    %v154 = vunpack.c.h.b16 %v105
    %v155 = vunpack.c.l.b16 %v106
    %v156 = vunpack.c.h.b16 %v106
    %v157 = vunpack.c.l.b16 %v107
    %v158 = vunpack.c.h.b16 %v107
    %v159 = vunpack.c.l.b16 %v108
    %v160 = vunpack.c.h.b16 %v108
    %v161 = vunpack.c.l.b16 %v109
    %v162 = vunpack.c.h.b16 %v109
    %v163 = vunpack.c.l.b16 %v110
    %v164 = vunpack.c.h.b16 %v110
    %v165 = vpack.c.b16 %v135, %v133
    %v166 = vpack.c.b16 %v136, %v134
    %v167 = vpack.c.b16 %v139, %v137
    %v168 = vpack.c.b16 %v140, %v138
    %v169 = vpack.c.b16 %v143, %v141
    %v170 = vpack.c.b16 %v144, %v142
    %v171 = vpack.c.b16 %v147, %v145
    %v172 = vpack.c.b16 %v148, %v146
    %v173 = vpack.c.b16 %v151, %v149
    %v174 = vpack.c.b16 %v152, %v150
    %v175 = vpack.c.b16 %v155, %v153
    %v176 = vpack.c.b16 %v156, %v154
    %v177 = vpack.c.b16 %v159, %v157
    %v178 = vpack.c.b16 %v160, %v158
    %v179 = vpack.c.b16 %v163, %v161
    %v180 = vpack.c.b16 %v164, %v162
    %197 = vmatpush.bf16.msra.mxu0 %v179
    %198 = vmatpush.bf16.msra.mxu0 %v177
    %199 = vmatpush.bf16.msra.mxu0 %v175
    %200 = vmatpush.bf16.msra.mxu0 %v173
    %201 = vmatpush.bf16.msra.mxu0 %v171
    %202 = vmatpush.bf16.msra.mxu0 %v169
    %203 = vmatpush.bf16.msra.mxu0 %v167
    %204 = vmatpush.bf16.msra.mxu0 %v165
    %205 = vmatmul.bf16.gmra.mxu0 %v94
    %v206 = vpop.f32.mrf.mxu0
    %v207 = vadd.f32 %v113, %v206
    %v208 = vpop.f32.mrf.mxu0
    %v209 = vadd.f32 %v113, %v208
    %210 = vdwg.mxu0
    %211 = vmatpush.bf16.msra.mxu0 %v180
    %212 = vmatpush.bf16.msra.mxu0 %v178
    %213 = vmatpush.bf16.msra.mxu0 %v176
    %214 = vmatpush.bf16.msra.mxu0 %v174
    %215 = vmatpush.bf16.msra.mxu0 %v172
    %216 = vmatpush.bf16.msra.mxu0 %v170
    %217 = vmatpush.bf16.msra.mxu0 %v168
    %218 = vmatpush.bf16.msra.mxu0 %v166
    %219 = vmatmul.bf16.gmra.mxu0 %v94
    %v220 = vpop.f32.mrf.mxu0
    %v221 = vadd.f32 %v114, %v220
    %v222 = vpop.f32.mrf.mxu0
    %v223 = vadd.f32 %v114, %v222
    %224 = vdwg.mxu0
    %v225 = vmul.f32 %v207, 0.7978846
    %v226 = vmul.f32 %v221, 0.7978846
    %v227 = vmul.f32 %v209, 0.7978846
    %v228 = vmul.f32 %v223, 0.7978846
    %v229 = vmul.f32 %v207, %v207
    %v230 = vmul.f32 %v221, %v221
    %v231 = vmul.f32 %v209, %v209
    %v232 = vmul.f32 %v223, %v223
    %v233 = vmul.f32 %v229, 0.044715
    %v234 = vmul.f32 %v230, 0.044715
    %v235 = vmul.f32 %v231, 0.044715
    %v236 = vmul.f32 %v232, 0.044715
    %v237 = vadd.f32 %v233, 1.0
    %v238 = vadd.f32 %v234, 1.0
    %v239 = vadd.f32 %v235, 1.0
    %v240 = vadd.f32 %v236, 1.0
    %v241 = vmul.f32 %v225, %v237
    %v242 = vmul.f32 %v226, %v238
    %v243 = vmul.f32 %v227, %v239
    %v244 = vmul.f32 %v228, %v240
    %v245 = vmul.f32 %v207, 0.5
    %v246 = vmul.f32 %v221, 0.5
    %v247 = vmul.f32 %v209, 0.5
    %v248 = vmul.f32 %v223, 0.5
    %v249 = vtanh.pop %v241
    %v250 = vtanh.pop %v242
    %v251 = vtanh.pop %v243
    %v252 = vtanh.pop %v244
    %v253 = vadd.f32 %v249, 1.0
    %v254 = vadd.f32 %v250, 1.0
    %v255 = vadd.f32 %v251, 1.0
    %v256 = vadd.f32 %v252, 1.0
    %v257 = vmul.f32 %v245, %v253
    %v258 = vmul.f32 %v246, %v254
    %v259 = vmul.f32 %v247, %v255
    %v260 = vmul.f32 %v248, %v256
    %v261 = vld [vmem:[#allocation2] sm:$0xff]
    %v262 = vld [vmem:[#allocation2 + $0x8] sm:$0xff]
    %v263 = vpack.c.bf16 %v259, %v257
    %v264 = vpack.c.bf16 %v260, %v258
    %v265 = vld [vmem:[#allocation9] sm:$0xf]
    %v266 = vld [vmem:[#allocation9 + $0x4] sm:$0xf]
    %v267 = vld [vmem:[#allocation9 + $0x8] sm:$0xf]
    %v268 = vld [vmem:[#allocation9 + $0xc] sm:$0xf]
    %v269 = vld [vmem:[#allocation9 + $0x10] sm:$0xf]
    %v270 = vld [vmem:[#allocation9 + $0x14] sm:$0xf]
    %v271 = vld [vmem:[#allocation9 + $0x18] sm:$0xf]
    %v272 = vld [vmem:[#allocation9 + $0x1c] sm:$0xf]
    %v273 = vld [vmem:[#allocation9 + $0x20] sm:$0xf]
    %v274 = vld [vmem:[#allocation9 + $0x24] sm:$0xf]
    %v275 = vld [vmem:[#allocation9 + $0x28] sm:$0xf]
    %v276 = vld [vmem:[#allocation9 + $0x2c] sm:$0xf]
    %v277 = vld [vmem:[#allocation9 + $0x30] sm:$0xf]
    %v278 = vld [vmem:[#allocation9 + $0x34] sm:$0xf]
    %v279 = vld [vmem:[#allocation9 + $0x38] sm:$0xf]
    %v280 = vld [vmem:[#allocation9 + $0x3c] sm:$0xf]
    %v281 = vld [vmem:[#allocation9 + $0x40] sm:$0xf]
    %v282 = vld [vmem:[#allocation9 + $0x44] sm:$0xf]
    %v283 = vld [vmem:[#allocation9 + $0x48] sm:$0xf]
    %v284 = vld [vmem:[#allocation9 + $0x4c] sm:$0xf]
    %v285 = vld [vmem:[#allocation9 + $0x50] sm:$0xf]
    %v286 = vld [vmem:[#allocation9 + $0x54] sm:$0xf]
    %v287 = vld [vmem:[#allocation9 + $0x58] sm:$0xf]
    %v288 = vld [vmem:[#allocation9 + $0x5c] sm:$0xf]
    %v289 = vld [vmem:[#allocation9 + $0x60] sm:$0xf]
    %v290 = vld [vmem:[#allocation9 + $0x64] sm:$0xf]
    %v291 = vld [vmem:[#allocation9 + $0x68] sm:$0xf]
    %v292 = vld [vmem:[#allocation9 + $0x6c] sm:$0xf]
    %v293 = vld [vmem:[#allocation9 + $0x70] sm:$0xf]
    %v294 = vld [vmem:[#allocation9 + $0x74] sm:$0xf]
    %v295 = vld [vmem:[#allocation9 + $0x78] sm:$0xf]
    %v296 = vld [vmem:[#allocation9 + $0x7c] sm:$0xf]
    %v329 = vunpack.c.l.b16 %v265
    %v330 = vunpack.c.l.b16 %v266
    %v331 = vunpack.c.l.b16 %v267
    %v332 = vunpack.c.l.b16 %v268
    %v333 = vunpack.c.l.b16 %v269
    %v334 = vunpack.c.l.b16 %v270
    %v335 = vunpack.c.l.b16 %v271
    %v336 = vunpack.c.l.b16 %v272
    %v337 = vunpack.c.l.b16 %v273
    %v338 = vunpack.c.l.b16 %v274
    %v339 = vunpack.c.l.b16 %v275
    %v340 = vunpack.c.l.b16 %v276
    %v341 = vunpack.c.l.b16 %v277
    %v342 = vunpack.c.l.b16 %v278
    %v343 = vunpack.c.l.b16 %v279
    %v344 = vunpack.c.l.b16 %v280
    %v345 = vunpack.c.l.b16 %v281
    %v346 = vunpack.c.l.b16 %v282
    %v347 = vunpack.c.l.b16 %v283
    %v348 = vunpack.c.l.b16 %v284
    %v349 = vunpack.c.l.b16 %v285
    %v350 = vunpack.c.l.b16 %v286
    %v351 = vunpack.c.l.b16 %v287
    %v352 = vunpack.c.l.b16 %v288
    %v353 = vunpack.c.l.b16 %v289
    %v354 = vunpack.c.l.b16 %v290
    %v355 = vunpack.c.l.b16 %v291
    %v356 = vunpack.c.l.b16 %v292
    %v357 = vunpack.c.l.b16 %v293
    %v358 = vunpack.c.l.b16 %v294
    %v359 = vunpack.c.l.b16 %v295
    %v360 = vunpack.c.l.b16 %v296
    %v361 = vpack.c.b16 %v330, %v329
    %v362 = vpack.c.b16 %v332, %v331
    %v363 = vpack.c.b16 %v334, %v333
    %v364 = vpack.c.b16 %v336, %v335
    %v365 = vpack.c.b16 %v338, %v337
    %v366 = vpack.c.b16 %v340, %v339
    %v367 = vpack.c.b16 %v342, %v341
    %v368 = vpack.c.b16 %v344, %v343
    %v369 = vpack.c.b16 %v346, %v345
    %v370 = vpack.c.b16 %v348, %v347
    %v371 = vpack.c.b16 %v350, %v349
    %v372 = vpack.c.b16 %v352, %v351
    %v373 = vpack.c.b16 %v354, %v353
    %v374 = vpack.c.b16 %v356, %v355
    %v375 = vpack.c.b16 %v358, %v357
    %v376 = vpack.c.b16 %v360, %v359
    %393 = vmatpush.bf16.msra.mxu0 %v368
    %394 = vmatpush.bf16.msra.mxu0 %v367
    %395 = vmatpush.bf16.msra.mxu0 %v366
    %396 = vmatpush.bf16.msra.mxu0 %v365
    %397 = vmatpush.bf16.msra.mxu0 %v364
    %398 = vmatpush.bf16.msra.mxu0 %v363
    %399 = vmatpush.bf16.msra.mxu0 %v362
    %400 = vmatpush.bf16.msra.mxu0 %v361
    %401 = vmatmul.bf16.gmra.mxu0 %v263
    %v402 = vpop.f32.mrf.mxu0
    %v403 = vadd.f32 0.0, %v402
    %v404 = vpop.f32.mrf.mxu0
    %v405 = vadd.f32 0.0, %v404
    %406 = vdwg.mxu0
    %407 = vmatpush.bf16.msra.mxu0 %v376
    %408 = vmatpush.bf16.msra.mxu0 %v375
    %409 = vmatpush.bf16.msra.mxu0 %v374
    %410 = vmatpush.bf16.msra.mxu0 %v373
    %411 = vmatpush.bf16.msra.mxu0 %v372
    %412 = vmatpush.bf16.msra.mxu0 %v371
    %413 = vmatpush.bf16.msra.mxu0 %v370
    %414 = vmatpush.bf16.msra.mxu0 %v369
    %415 = vmatmul.bf16.gmra.mxu0 %v264
    %v416 = vpop.f32.mrf.mxu0
    %v417 = vadd.f32 %v403, %v416
    %v418 = vpop.f32.mrf.mxu0
    %v419 = vadd.f32 %v405, %v418
    %420 = vdwg.mxu0
    %v421 = vadd.f32 %v261, %v417
    %v422 = vadd.f32 %v262, %v419
    %423 = vst [vmem:[#allocation2] sm:$0xff] %v421
    %424 = vst [vmem:[#allocation2 + $0x8] sm:$0xff] %v422
    // Predicated region
    $region42: #{tpu_custom_call.1} parent=1 // pred_check
      %p425 = pneg %p82
    $region43: #{tpu_custom_call.1} parent=1 // pred_check_branch
      %427 = sbr.rel (%p425) target = $region45
    $region44: #{tpu_custom_call.1} parent=1 // pred_region
      %v428 = vld [vmem:[#allocation2] sm:$0xff]
      %v429 = vld [vmem:[#allocation2 + $0x8] sm:$0xff]
      %430 = vst [vmem:[#allocation11] sm:$0xff] %v428
      %431 = vst [vmem:[#allocation11 + $0x8] sm:$0xff] %v429
    $region45: #{tpu_custom_call.1} parent=1 // pred_fallthru
      _
    // Predicated region
    $region46: #{tpu_custom_call.1} parent=1 // pred_check
      _
    $region47: #{tpu_custom_call.1} parent=1 // pred_check_branch
      %433 = sbr.rel (0) target = $region49
    $region48: #{tpu_custom_call.1} parent=1 // pred_region
      %435 = vsyncadd [#allocation5], 0
      %s436 = sshll.u32 [#allocation11], 4
      %s437 = int_to_ptr.vmem [resolvable:$true] %s436
      %s438 = sshll.u32 %s5, 4
      %s439 = int_to_ptr.hbm [resolvable:$true] %s438
      %444 = dma.vmem_to_hbm [thread:$0]  %s437, 256, %s439, [#allocation5], 128, 128, 8
    $region49: #{tpu_custom_call.1} parent=1 // pred_fallthru
      _
    // Predicated region
    $region50: #{tpu_custom_call.1} parent=1 // pred_check
      _
    $region51: #{tpu_custom_call.1} parent=1 // pred_check_branch
      %446 = sbr.rel (0) target = $region53
    $region52: #{tpu_custom_call.1} parent=1 // pred_region
      %448 = dma.done [#allocation5], 256
    $region53: #{tpu_custom_call.1} parent=1 // pred_fallthru
      _
    %449 = vsyncpa [#allocation4], 1
    %450 = vsyncpa [#allocation7], 1
    %451 = vsyncpa [#allocation10], 1
    %452 = vsyncpa [#allocation5], 1

</llo_original>
